<compile_context>
chip_gen: v6e
topology: v6e:2x2x1
jax: 0.10.0
libtpu: 0.0.40
codegen_flags: <defaults>
</compile_context>

<pallas_src>
import math

import jax
import jax.numpy as jnp
from jax.experimental import pallas as pl
from jax.experimental.pallas import tpu as pltpu


_C1 = math.sqrt(2.0 / math.pi)            # sqrt(2/pi)
_C2 = _C1 * 0.044715                      # sqrt(2/pi) * 0.044715


def _gelu_kernel(x_ref, o_ref):
    x = x_ref[...].astype(jnp.float32)
    # sqrt(2/pi) * (x + 0.044715*x^3) == x * (C1 + C2*x*x)   (constant-folded)
    inner = x * (_C1 + _C2 * (x * x))
    o_ref[...] = (0.5 * x * (1.0 + jnp.tanh(inner))).astype(o_ref.dtype)


def _chip_defaults():
    """(target_block_bytes, min_grid_steps) tuned per TPU generation."""
    try:
        kind = jax.devices()[0].device_kind.lower()
    except Exception:
        kind = ""
    if "v5 lite" in kind or "v5e" in kind or "v5lite" in kind:
        # v5e: 16 MiB scoped-VMEM default -> 4 double-buffered 3 MiB tiles fit.
        return 3 * 1024 * 1024, 1
    if "v7" in kind or "tpu7" in kind:
        # v7x: 3.2 TB/s HBM -> bigger tiles amortize the ~0.35us/step cost;
        # 2 TensorCores -> make sure the "parallel" grid has >= 2 steps.
        return 6 * 1024 * 1024, 2
    # v6e and default: 32 MiB scoped default; ~4 MiB is past the roofline knee.
    return 4 * 1024 * 1024, 1


def _run_gelu_2d(x2d, rows, cols, itemsize, target_block_bytes, min_steps):
    """Run the elementwise kernel on a (rows, cols) slab with a 1-D row grid."""
    sub = 8 * max(1, 4 // itemsize)                 # sublane quantum per dtype
    # Size the row tile off the f32 working set (covers the in-kernel upcast
    # for bf16 so intermediates never double VMEM pressure).
    per_row_bytes = cols * max(itemsize, 4)
    rt = max(sub, (target_block_bytes // per_row_bytes) // sub * sub)
    if min_steps > 1 and rows >= min_steps * sub and pl.cdiv(rows, rt) < min_steps:
        # v7x: split into >= min_steps blocks so both TensorCores get work.
        rt = max(sub, pl.cdiv(rows, min_steps) // sub * sub)
    if rt >= rows:
        rt = rows                                   # full-dim block: always legal
    grid = (pl.cdiv(rows, rt),)                     # ragged last block is masked

    return pl.pallas_call(
        _gelu_kernel,
        out_shape=jax.ShapeDtypeStruct((rows, cols), x2d.dtype),
        grid_spec=pltpu.PrefetchScalarGridSpec(
            num_scalar_prefetch=0,
            grid=grid,
            in_specs=[pl.BlockSpec((rt, cols), lambda i: (i, 0))],
            out_specs=pl.BlockSpec((rt, cols), lambda i: (i, 0)),
        ),
        compiler_params=pltpu.CompilerParams(
            dimension_semantics=("parallel",),
        ),
    )(x2d)


def gelu_pallas(x: jax.Array, *, target_block_bytes: int | None = None) -> jax.Array:
    """Tanh-approx GELU for any shape / float dtype (f32, bf16, ...)."""
    orig_shape = x.shape
    orig_dtype = x.dtype
    n = math.prod(orig_shape) if orig_shape else 1
    if n == 0:
        return x                                    # empty: nothing to compute

    itemsize = jnp.dtype(orig_dtype).itemsize
    tbytes, min_steps = _chip_defaults()
    if target_block_bytes is not None:
        tbytes = target_block_bytes

    if len(orig_shape) >= 2:
        # Natural (leading, hidden) view: free reshape, zero extra HBM passes.
        # Non-128 hidden -> full-dim last block dim (masked stores); ragged
        # leading dim -> masked last grid block.  Both beat pad+slice traffic.
        hidden = orig_shape[-1]
        lead = n // hidden
        x2d = x.reshape(lead, hidden)
        out2d = _run_gelu_2d(x2d, lead, hidden, itemsize, tbytes, min_steps)
        return out2d.reshape(orig_shape)

    # Truly 1-D / 0-D: flatten and pad once to a lane-dense, aligned slab.
    sub = 8 * max(1, 4 // itemsize)
    cols = 512
    rows = pl.cdiv(pl.cdiv(n, cols), sub) * sub
    pad = rows * cols - n
    x2d = jnp.pad(x.reshape(-1), (0, pad)).reshape(rows, cols)
    out2d = _run_gelu_2d(x2d, rows, cols, itemsize, tbytes, min_steps)
    return out2d.reshape(-1)[:n].reshape(orig_shape)


def gelu_ref(x: jax.Array) -> jax.Array:
    # Literal transcription of the PyTorch forward.
    return 0.5 * x * (1.0 + jnp.tanh(_C1 * (x + 0.044715 * jnp.power(x, 3))))


if __name__ == "__main__":
    key = jax.random.PRNGKey(0)

    # Matches the module's example input: torch.rand(2, 4, 768) -> uniform [0, 1)
    x = jax.random.uniform(key, (2, 4, 768), dtype=jnp.float32)
    y = jax.block_until_ready(gelu_pallas(x))
    assert y.shape == x.shape and y.dtype == x.dtype
    assert jnp.allclose(y, gelu_ref(x), atol=1e-5, rtol=1e-5), "mismatch vs reference"

    # Aligned hidden but ragged leading dim: previously fell into the pad path,
    # now handled by a ragged last grid block (single HBM read + write).
    x2 = jax.random.normal(jax.random.PRNGKey(1), (10, 768), dtype=jnp.float32)
    y2 = jax.block_until_ready(gelu_pallas(x2))
    assert jnp.allclose(y2, gelu_ref(x2), atol=1e-5, rtol=1e-5), "mismatch (ragged rows)"

    # Non-multiple-of-128 hidden: natural view + masked stores, no pad/slice.
    x3 = jax.random.normal(jax.random.PRNGKey(2), (3, 5, 100), dtype=jnp.float32)
    y3 = jax.block_until_ready(gelu_pallas(x3))
    assert y3.shape == x3.shape
    assert jnp.allclose(y3, gelu_ref(x3), atol=1e-5, rtol=1e-5), "mismatch (unaligned hidden)"

    # bf16 path: block sized off the f32 working set, f32 compute inside.
    x4 = jax.random.normal(jax.random.PRNGKey(3), (16, 256), dtype=jnp.bfloat16)
    y4 = jax.block_until_ready(gelu_pallas(x4))
    assert y4.dtype == jnp.bfloat16
    assert jnp.allclose(y4.astype(jnp.float32),
                        gelu_ref(x4.astype(jnp.float32)),
                        atol=2e-2, rtol=2e-2), "mismatch (bf16)"

    print("KERNEL_OK")
</pallas_src>

<mosaic_0001>
module attributes {stable_mosaic.version = 11 : i64} {
  func.func @_gelu_kernel(%arg0: i32, %arg1: memref<8x768xf32, #tpu.memory_space<vmem>>, %arg2: memref<8x768xf32, #tpu.memory_space<vmem>>) attributes {dimension_semantics = [#tpu.dimension_semantics<parallel>], iteration_bounds = array<i64: 1>, scalar_prefetch = 0 : i64, scratch_operands = 0 : i64, tpu.core_type = #tpu.core_type<tc>, window_params = [{transform_indices = @transform_0, window_bounds = array<i64: 8, 768>}, {transform_indices = @transform_1, window_bounds = array<i64: 8, 768>}]} {
    %c0 = arith.constant 0 : index
    %c0_0 = arith.constant 0 : index
    %0 = vector.load %arg1[%c0, %c0_0] : memref<8x768xf32, #tpu.memory_space<vmem>>, vector<8x768xf32>
    %1 = arith.mulf %0, %0 : vector<8x768xf32>
    %cst = arith.constant 0.0356774069 : f32
    %2 = vector.broadcast %cst : f32 to vector<8x768xf32>
    %3 = arith.mulf %2, %1 : vector<8x768xf32>
    %cst_1 = arith.constant 0.797884583 : f32
    %4 = vector.broadcast %cst_1 : f32 to vector<8x768xf32>
    %5 = arith.addf %4, %3 : vector<8x768xf32>
    %6 = arith.mulf %0, %5 : vector<8x768xf32>
    %cst_2 = arith.constant 5.000000e-01 : f32
    %7 = vector.broadcast %cst_2 : f32 to vector<8x768xf32>
    %8 = arith.mulf %7, %0 : vector<8x768xf32>
    %9 = math.tanh %6 : vector<8x768xf32>
    %cst_3 = arith.constant 1.000000e+00 : f32
    %10 = vector.broadcast %cst_3 : f32 to vector<8x768xf32>
    %11 = arith.addf %10, %9 : vector<8x768xf32>
    %12 = arith.mulf %8, %11 : vector<8x768xf32>
    %c0_4 = arith.constant 0 : index
    %c0_5 = arith.constant 0 : index
    %13 = vector.load %arg2[%c0_4, %c0_5] : memref<8x768xf32, #tpu.memory_space<vmem>>, vector<8x768xf32>
    tpu.vector_store %arg2[%c0_4, %c0_5], %12 {strides = array<i32>} : memref<8x768xf32, #tpu.memory_space<vmem>>, vector<8x768xf32>,
    return
  }
  func.func @transform_0(%arg0: i32) -> (i32, i32) {
    %c0_i32 = arith.constant 0 : i32
    %c0_i32_0 = arith.constant 0 : i32
    return %arg0, %c0_i32 : i32, i32
  }
  func.func @transform_1(%arg0: i32) -> (i32, i32) {
    %c0_i32 = arith.constant 0 : i32
    %c0_i32_0 = arith.constant 0 : i32
    return %arg0, %c0_i32 : i32, i32
  }
}

</mosaic_0001>

<llo_original>
// kernel: tpu_custom_call.1
$region0: #{tpu_custom_call.1}
  #allocation0 [shape = 'u32[]', space=smem, size = 0x4, offset = 0x4, fixed_abs, tag = 'smem constant byte address 0x4 - core index']
  #allocation1 [shape = 'u32[144,128]{1,0:T(1,128)}', space=vmem, size = 0x12000, scoped, tag = 'internal scratch']
  %s0 = inlined_call_operand.hbm [shape: f32[8,768], index: 0, kind: input, shape index: {}]
  %s1 = inlined_call_operand.hbm [shape: f32[8,768], index: 1, kind: output, shape index: {}]
  %s2 = sld [smem:[#allocation0]]
  $region18: #{tpu_custom_call.1} parent=0
    _
  %s4 = ssub.s32 1, %s2
  %s5 = scalar_select 0, %s4, %s2
  $region1: #{tpu_custom_call.1} parent=0
    #allocation2 [shape = 'u8[24576]{0}', space=vmem, size = 0x6000, scoped, tag = 'input window, operand 0, single buffered']
    #allocation3 [shape = 's32[1]{0}', space=sflag, size = 0x4, scoped, tag = 'scoped memory for tpu_custom_call.1']
    #allocation4 [shape = 's32[1]{0}', space=sflag, size = 0x4, scoped, tag = 'scoped memory for tpu_custom_call.1']
    #allocation5 [shape = 'u8[24576]{0}', space=vmem, size = 0x6000, scoped, tag = 'output window, operand 0, single buffered']
    %6 = vsyncpa [#allocation3], 0
    %7 = vsyncpa [#allocation4], 0
    // Predicated region
    $region2: #{tpu_custom_call.1} parent=1 // pred_check
      _
    $region3: #{tpu_custom_call.1} parent=1 // pred_check_branch
      %9 = sbr.rel (0) target = $region5
    $region4: #{tpu_custom_call.1} parent=1 // pred_region
      %s11 = ssub.s32 768, 768
      %12 = vsyncadd [#allocation3], %s11
      %s14 = sshll.u32 [#allocation2], 4
      %s15 = int_to_ptr.vmem [resolvable:$true] %s14
      %17 = dma.hbm_to_vmem [thread:$0]  %s0, 768, %s15, [#allocation3]
    $region5: #{tpu_custom_call.1} parent=1 // pred_fallthru
      _
    // Predicated region
    $region6: #{tpu_custom_call.1} parent=1 // pred_check
      _
    $region7: #{tpu_custom_call.1} parent=1 // pred_check_branch
      %19 = sbr.rel (0) target = $region9
    $region8: #{tpu_custom_call.1} parent=1 // pred_region
      %20 = dma.done [#allocation3], 768
    $region9: #{tpu_custom_call.1} parent=1 // pred_fallthru
      _
    %v21 = vld [vmem:[#allocation2] sm:$0xff]
    %v22 = vld [vmem:[#allocation2 + $0x8] sm:$0xff]
    %v23 = vld [vmem:[#allocation2 + $0x10] sm:$0xff]
    %v24 = vld [vmem:[#allocation2 + $0x18] sm:$0xff]
    %v25 = vld [vmem:[#allocation2 + $0x20] sm:$0xff]
    %v26 = vld [vmem:[#allocation2 + $0x28] sm:$0xff]
    %v27 = vmul.f32 %v21, %v21
    %v28 = vmul.f32 %v22, %v22
    %v29 = vmul.f32 %v23, %v23
    %v30 = vmul.f32 %v24, %v24
    %v31 = vmul.f32 %v25, %v25
    %v32 = vmul.f32 %v26, %v26
    %v33 = vmul.f32 %v27, 0.035677407
    %v34 = vmul.f32 %v28, 0.035677407
    %v35 = vmul.f32 %v29, 0.035677407
    %v36 = vmul.f32 %v30, 0.035677407
    %v37 = vmul.f32 %v31, 0.035677407
    %v38 = vmul.f32 %v32, 0.035677407
    %v39 = vadd.f32 %v33, 0.7978846
    %v40 = vadd.f32 %v34, 0.7978846
    %v41 = vadd.f32 %v35, 0.7978846
    %v42 = vadd.f32 %v36, 0.7978846
    %v43 = vadd.f32 %v37, 0.7978846
    %v44 = vadd.f32 %v38, 0.7978846
    %v45 = vmul.f32 %v21, %v39
    %v46 = vmul.f32 %v22, %v40
    %v47 = vmul.f32 %v23, %v41
    %v48 = vmul.f32 %v24, %v42
    %v49 = vmul.f32 %v25, %v43
    %v50 = vmul.f32 %v26, %v44
    %v51 = vmul.f32 %v21, 0.5
    %v52 = vmul.f32 %v22, 0.5
    %v53 = vmul.f32 %v23, 0.5
    %v54 = vmul.f32 %v24, 0.5
    %v55 = vmul.f32 %v25, 0.5
    %v56 = vmul.f32 %v26, 0.5
    %v57 = vtanh.pop %v45
    %v58 = vtanh.pop %v46
    %v59 = vtanh.pop %v47
    %v60 = vtanh.pop %v48
    %v61 = vtanh.pop %v49
    %v62 = vtanh.pop %v50
    %v63 = vadd.f32 %v57, 1.0
    %v64 = vadd.f32 %v58, 1.0
    %v65 = vadd.f32 %v59, 1.0
    %v66 = vadd.f32 %v60, 1.0
    %v67 = vadd.f32 %v61, 1.0
    %v68 = vadd.f32 %v62, 1.0
    %v69 = vmul.f32 %v51, %v63
    %v70 = vmul.f32 %v52, %v64
    %v71 = vmul.f32 %v53, %v65
    %v72 = vmul.f32 %v54, %v66
    %v73 = vmul.f32 %v55, %v67
    %v74 = vmul.f32 %v56, %v68
    %75 = vst [vmem:[#allocation5] sm:$0xff] %v69
    %76 = vst [vmem:[#allocation5 + $0x8] sm:$0xff] %v70
    %77 = vst [vmem:[#allocation5 + $0x10] sm:$0xff] %v71
    %78 = vst [vmem:[#allocation5 + $0x18] sm:$0xff] %v72
    %79 = vst [vmem:[#allocation5 + $0x20] sm:$0xff] %v73
    %80 = vst [vmem:[#allocation5 + $0x28] sm:$0xff] %v74
    // Predicated region
    $region10: #{tpu_custom_call.1} parent=1 // pred_check
      _
    $region11: #{tpu_custom_call.1} parent=1 // pred_check_branch
      %82 = sbr.rel (0) target = $region13
    $region12: #{tpu_custom_call.1} parent=1 // pred_region
      %s84 = ssub.s32 768, 768
      %85 = vsyncadd [#allocation4], %s84
      %s87 = sshll.u32 [#allocation5], 4
      %s88 = int_to_ptr.vmem [resolvable:$true] %s87
      %90 = dma.vmem_to_hbm [thread:$0]  %s88, 768, %s1, [#allocation4]
    $region13: #{tpu_custom_call.1} parent=1 // pred_fallthru
      _
    // Predicated region
    $region14: #{tpu_custom_call.1} parent=1 // pred_check
      _
    $region15: #{tpu_custom_call.1} parent=1 // pred_check_branch
      %92 = sbr.rel (0) target = $region17
    $region16: #{tpu_custom_call.1} parent=1 // pred_region
      %93 = dma.done [#allocation4], 768
    $region17: #{tpu_custom_call.1} parent=1 // pred_fallthru
      _
    %94 = vsyncpa [#allocation3], 1
    %95 = vsyncpa [#allocation4], 1

</llo_original>
